<compile_context>
chip_gen: v7x
topology: tpu7x:2x2x1
jax: 0.10.0
libtpu: 0.0.40
codegen_flags: <defaults>
</compile_context>

<pallas_src>
import jax
import jax.numpy as jnp
from jax.experimental import pallas as pl
from jax.experimental.pallas import tpu as pltpu

BN_EPS = 1e-5
# Conservative VMEM budget for the streamed tiles (double-buffered x + out):
# fits comfortably inside v7x's 32 MiB default scoped VMEM.
_VMEM_BUDGET_BYTES = 24 << 20


def _round_up(v, m):
    return (v + m - 1) // m * m


def pointmlp_kernel(x_ref, w_ref, b_ref, s_ref, sh_ref, o_ref):
    """One tile of points: Linear (f32 operands, f32 acc) -> ReLU -> folded BN affine."""
    h = jnp.dot(x_ref[...], w_ref[...], preferred_element_type=jnp.float32)
    h = jnp.maximum(h + b_ref[...], 0.0)
    o_ref[...] = (h * s_ref[...] + sh_ref[...]).astype(o_ref.dtype)


def prepare_params(w, b, gamma, beta, mean, var):
    """Fold eval-mode BatchNorm1d into a per-channel scale/shift.  Run ONCE at init."""
    w = jnp.asarray(w, jnp.float32)                      # [c_in, c_out]
    b = jnp.asarray(b, jnp.float32).reshape(1, -1)
    gamma = jnp.asarray(gamma, jnp.float32).reshape(1, -1)
    beta = jnp.asarray(beta, jnp.float32).reshape(1, -1)
    mean = jnp.asarray(mean, jnp.float32).reshape(1, -1)
    var = jnp.asarray(var, jnp.float32).reshape(1, -1)
    scale = gamma / jnp.sqrt(var + BN_EPS)               # [1, c_out]
    shift = beta - mean * scale                          # [1, c_out]
    return w, b, scale, shift


def pointmlp_forward(x, prepared, *, tile_n=None, out_dtype=jnp.float32):
    """PointMLP.forward: y = BN(ReLU(Lin(x))). Returns [N, out_channels] in out_dtype."""
    w, b, scale, shift = prepared
    n, c_in = x.shape
    c_out = w.shape[1]

    # Tile sizing: default to 2 grid steps (keeps both v7x TensorCores busy,
    # minimizes per-step overhead), capped by the VMEM budget, rows multiple of 8.
    row_bytes = 2 * 4 * (c_in + c_out)                    # double-buffered f32 tiles
    vmem_cap_rows = max(8, (_VMEM_BUDGET_BYTES // row_bytes) // 8 * 8)
    if tile_n is None:
        tile_n = _round_up(pl.cdiv(n, 2), 8)
    tile_n = max(8, min(_round_up(tile_n, 8), vmem_cap_rows, _round_up(n, 8)))
    n_p = _round_up(n, tile_n)

    x = x.astype(jnp.float32)
    # Row padding only when N is ragged w.r.t. the tile (no-op otherwise).
    x_p = x if n_p == n else jnp.zeros((n_p, c_in), jnp.float32).at[:n].set(x)

    full = lambda i: (0, 0)
    out_bytes = jnp.dtype(out_dtype).itemsize
    cost = pl.CostEstimate(
        flops=2 * n_p * c_in * c_out + 3 * n_p * c_out,
        transcendentals=0,
        bytes_accessed=(n_p * c_in * 4 + c_in * c_out * 4 + 3 * c_out * 4
                        + n_p * c_out * out_bytes),
    )

    out = pl.pallas_call(
        pointmlp_kernel,
        out_shape=jax.ShapeDtypeStruct((n_p, c_out), out_dtype),
        grid_spec=pltpu.PrefetchScalarGridSpec(
            num_scalar_prefetch=0,
            grid=(n_p // tile_n,),
            in_specs=[
                pl.BlockSpec((tile_n, c_in), lambda i: (i, 0)),   # streamed point tile
                pl.BlockSpec((c_in, c_out), full),                # weight (resident)
                pl.BlockSpec((1, c_out), full),                   # bias
                pl.BlockSpec((1, c_out), full),                   # BN scale
                pl.BlockSpec((1, c_out), full),                   # BN shift
            ],
            out_specs=pl.BlockSpec((tile_n, c_out), lambda i: (i, 0)),
        ),
        compiler_params=pltpu.CompilerParams(
            dimension_semantics=("parallel",),                    # independent tiles
        ),
        cost_estimate=cost,
    )(x_p, w, b, scale, shift)

    # Rows were padded only if N was ragged; channel dim is exact -> no copy here.
    return out if n_p == n else out[:n]


def reference_forward(x, raw_params):
    """Pure-JAX reference matching PointMLP.forward (eval-mode BN)."""
    w, b, gamma, beta, mean, var = raw_params
    h = jnp.maximum(x @ w + b, 0.0)
    return (h - mean) / jnp.sqrt(var + BN_EPS) * gamma + beta


if __name__ == "__main__":
    key = jax.random.PRNGKey(0)
    kx, kw, kb, kg, kbe, km, kv = jax.random.split(key, 7)

    n_points, in_channels, out_channels = 1024, 16, 64

    x = jax.random.normal(kx, (n_points, in_channels), jnp.float32)
    w = jax.random.normal(kw, (in_channels, out_channels), jnp.float32) * 0.2
    b = jax.random.normal(kb, (1, out_channels), jnp.float32) * 0.1
    gamma = 1.0 + 0.1 * jax.random.normal(kg, (1, out_channels), jnp.float32)
    beta = 0.1 * jax.random.normal(kbe, (1, out_channels), jnp.float32)
    mean = 0.05 * jax.random.normal(km, (1, out_channels), jnp.float32)
    var = 1.0 + 0.1 * jax.random.uniform(kv, (1, out_channels), jnp.float32)
    raw_params = (w, b, gamma, beta, mean, var)

    # One-time parameter preparation (hoisted out of the per-call path).
    prepared = prepare_params(*raw_params)
    prepared = jax.block_until_ready(prepared)

    out = pointmlp_forward(x, prepared)
    jax.block_until_ready(out)

    ref = reference_forward(x, raw_params)
    assert out.shape == (n_points, out_channels)
    # f32 operands throughout; tolerance only covers possible default-precision
    # (bf16-pass) MXU lowering differences between the kernel and XLA reference.
    assert bool(jnp.allclose(out, ref, atol=1e-2, rtol=1e-2))

    print("KERNEL_OK")
</pallas_src>

<mosaic_0001>
module attributes {stable_mosaic.version = 11 : i64} {
  func.func @pointmlp_kernel(%arg0: i32, %arg1: memref<512x16xf32, #tpu.memory_space<vmem>>, %arg2: memref<16x64xf32, #tpu.memory_space<vmem>>, %arg3: memref<1x64xf32, #tpu.memory_space<vmem>>, %arg4: memref<1x64xf32, #tpu.memory_space<vmem>>, %arg5: memref<1x64xf32, #tpu.memory_space<vmem>>, %arg6: memref<512x64xf32, #tpu.memory_space<vmem>>) attributes {dimension_semantics = [#tpu.dimension_semantics<parallel>], iteration_bounds = array<i64: 2>, scalar_prefetch = 0 : i64, scratch_operands = 0 : i64, tpu.core_type = #tpu.core_type<tc>, window_params = [{transform_indices = @transform_0, window_bounds = array<i64: 512, 16>}, {pipeline_mode = #tpu.pipeline_mode<synchronous>, transform_indices = @transform_1, window_bounds = array<i64: 16, 64>}, {pipeline_mode = #tpu.pipeline_mode<synchronous>, transform_indices = @transform_2, window_bounds = array<i64: 1, 64>}, {pipeline_mode = #tpu.pipeline_mode<synchronous>, transform_indices = @transform_3, window_bounds = array<i64: 1, 64>}, {pipeline_mode = #tpu.pipeline_mode<synchronous>, transform_indices = @transform_4, window_bounds = array<i64: 1, 64>}, {transform_indices = @transform_5, window_bounds = array<i64: 512, 64>}]} {
    %c0 = arith.constant 0 : index
    %c0_0 = arith.constant 0 : index
    %0 = vector.load %arg1[%c0, %c0_0] : memref<512x16xf32, #tpu.memory_space<vmem>>, vector<512x16xf32>
    %c0_1 = arith.constant 0 : index
    %c0_2 = arith.constant 0 : index
    %1 = vector.load %arg2[%c0_1, %c0_2] : memref<16x64xf32, #tpu.memory_space<vmem>>, vector<16x64xf32>
    %cst = arith.constant dense<0.000000e+00> : vector<512x64xf32>
    %2 = tpu.matmul %0, %1, %cst {dimension_numbers = #tpu.dot_dimension_numbers<[1], [0], [0], [1], [0, 0, 1, 1], [], []>} : vector<512x16xf32>, vector<16x64xf32>, vector<512x64xf32> -> vector<512x64xf32>
    %c0_3 = arith.constant 0 : index
    %c0_4 = arith.constant 0 : index
    %3 = vector.load %arg3[%c0_3, %c0_4] : memref<1x64xf32, #tpu.memory_space<vmem>>, vector<1x64xf32>
    %4 = vector.broadcast %3 : vector<1x64xf32> to vector<512x64xf32>
    %5 = arith.addf %2, %4 : vector<512x64xf32>
    %cst_5 = arith.constant 0.000000e+00 : f32
    %6 = vector.broadcast %cst_5 : f32 to vector<512x64xf32>
    %7 = arith.maximumf %5, %6 : vector<512x64xf32>
    %c0_6 = arith.constant 0 : index
    %c0_7 = arith.constant 0 : index
    %8 = vector.load %arg4[%c0_6, %c0_7] : memref<1x64xf32, #tpu.memory_space<vmem>>, vector<1x64xf32>
    %9 = vector.broadcast %8 : vector<1x64xf32> to vector<512x64xf32>
    %10 = arith.mulf %7, %9 : vector<512x64xf32>
    %c0_8 = arith.constant 0 : index
    %c0_9 = arith.constant 0 : index
    %11 = vector.load %arg5[%c0_8, %c0_9] : memref<1x64xf32, #tpu.memory_space<vmem>>, vector<1x64xf32>
    %12 = vector.broadcast %11 : vector<1x64xf32> to vector<512x64xf32>
    %13 = arith.addf %10, %12 : vector<512x64xf32>
    %c0_10 = arith.constant 0 : index
    %c0_11 = arith.constant 0 : index
    %14 = vector.load %arg6[%c0_10, %c0_11] : memref<512x64xf32, #tpu.memory_space<vmem>>, vector<512x64xf32>
    tpu.vector_store %arg6[%c0_10, %c0_11], %13 {strides = array<i32>} : memref<512x64xf32, #tpu.memory_space<vmem>>, vector<512x64xf32>,
    return
  }
  func.func @transform_0(%arg0: i32) -> (i32, i32) {
    %c0_i32 = arith.constant 0 : i32
    %c0_i32_0 = arith.constant 0 : i32
    return %arg0, %c0_i32 : i32, i32
  }
  func.func @transform_1(%arg0: i32) -> (i32, i32) {
    %c0_i32 = arith.constant 0 : i32
    %c0_i32_0 = arith.constant 0 : i32
    %c0_i32_1 = arith.constant 0 : i32
    return %c0_i32, %c0_i32_0 : i32, i32
  }
  func.func @transform_2(%arg0: i32) -> (i32, i32) {
    %c0_i32 = arith.constant 0 : i32
    %c0_i32_0 = arith.constant 0 : i32
    %c0_i32_1 = arith.constant 0 : i32
    return %c0_i32, %c0_i32_0 : i32, i32
  }
  func.func @transform_3(%arg0: i32) -> (i32, i32) {
    %c0_i32 = arith.constant 0 : i32
    %c0_i32_0 = arith.constant 0 : i32
    %c0_i32_1 = arith.constant 0 : i32
    return %c0_i32, %c0_i32_0 : i32, i32
  }
  func.func @transform_4(%arg0: i32) -> (i32, i32) {
    %c0_i32 = arith.constant 0 : i32
    %c0_i32_0 = arith.constant 0 : i32
    %c0_i32_1 = arith.constant 0 : i32
    return %c0_i32, %c0_i32_0 : i32, i32
  }
  func.func @transform_5(%arg0: i32) -> (i32, i32) {
    %c0_i32 = arith.constant 0 : i32
    %c0_i32_0 = arith.constant 0 : i32
    return %arg0, %c0_i32 : i32, i32
  }
}

</mosaic_0001>

<llo_original>
// kernel: tpu_custom_call.1
$region0: #{tpu_custom_call.1}
  #allocation0 [shape = 'u32[]', space=smem, size = 0x4, offset = 0x4, fixed_abs, tag = 'smem constant byte address 0x4 - core index']
  #allocation1 [shape = 'u32[144,128]{1,0:T(1,128)}', space=vmem, size = 0x12000, scoped, tag = 'internal scratch']
  %s0 = inlined_call_operand.vmem [shape: f32[1024,16], index: 0, kind: input, shape index: {}]
  %s1 = inlined_call_operand.vmem [shape: f32[16,64], index: 1, kind: input, shape index: {}]
  %s2 = inlined_call_operand.vmem [shape: f32[1,64], index: 2, kind: input, shape index: {}]
  %s3 = inlined_call_operand.vmem [shape: f32[1,64], index: 3, kind: input, shape index: {}]
  %s4 = inlined_call_operand.vmem [shape: f32[1,64], index: 4, kind: input, shape index: {}]
  %s5 = inlined_call_operand.vmem [shape: f32[1024,64], index: 5, kind: output, shape index: {}]
  %s6 = sld [smem:[#allocation0]]
  $region53: #{tpu_custom_call.1} parent=0
    _
  %s8 = ssub.s32 1, %s6
  %s9 = scalar_select 0, %s8, %s6
  loop: start=0, step=1, limit=4
  $region2: #{tpu_custom_call.1} parent=0 // loop_pre_header
    _
  $region3: #{tpu_custom_call.1} parent=0 // loop_header
    %s11 = sphi 0, %s15
    %p12 = scmp.ge.s32.totalorder %s11, 4
    %s21 = sphi 0, %s23
    %s24 = sphi 0, %s21
    %s25 = sphi 0, %s24
    %s41 = sphi 0, %s25
    %s45 = sphi 0, %s45
    %s47 = sphi 0, %s45
    %s48 = sphi 0, %s47
    %s62 = sphi 0, %s48
    %s66 = sphi 0, %s66
    %s68 = sphi 0, %s66
    %s69 = sphi 0, %s68
    %s83 = sphi 0, %s69
    %s87 = sphi 0, %s87
    %s89 = sphi 0, %s87
    %s90 = sphi 0, %s89
    %s104 = sphi 0, %s90
    %s108 = sphi 0, %s108
    %s110 = sphi 0, %s108
    %s111 = sphi 0, %s110
    %s125 = sphi 0, %s111
    %s131 = sphi 0, %s133
    %s134 = sphi 0, %s131
    %s135 = sphi 0, %s134
    %s151 = sphi 0, %s135
  $region4: #{tpu_custom_call.1} parent=0 // loop_header_branch
    %14 = sbr.rel (%p12) target = $region8
  $region5: #{tpu_custom_call.1} parent=0 // loop_body
    %s16 = ssub.s32 %s11, 1
    %s17 = ssub.s32 %s11, 2
    %s18 = sadd.s32 %s11, 1
    %s19 = ssub.s32 %s11, %s18
    %p20 = scmp.eq.s32.totalorder %s19, 0
    %s22 = sadd.s32 %s21, 1
    %s23 = scalar_select %p20, %s21, %s22
    %p26 = pneg %p20
    %p27 = scmp.eq.s32.totalorder %s11, 1
    %p28 = por %p26, %p27
    %p29 = scmp.ne.s32.totalorder %s21, %s24
    %p30 = scmp.eq.s32.totalorder %s11, 0
    %p31 = por %p29, %p30
    %p32 = scmp.ne.s32.totalorder %s21, %s24
    %p33 = scmp.eq.s32.totalorder %s16, 1
    %p34 = por %p32, %p33
    %p35 = scmp.ne.s32.totalorder %s24, %s25
    %p36 = scmp.eq.s32.totalorder %s16, 0
    %p37 = por %p35, %p36
    %p38 = scmp.ne.s32.totalorder %s24, %s25
    %p39 = scmp.eq.s32.totalorder %s17, 1
    %p40 = por %p38, %p39
    %p42 = scmp.ne.s32.totalorder %s25, %s41
    %p43 = scmp.eq.s32.totalorder %s17, 0
    %p44 = por %p42, %p43
    %s46 = sadd.s32 %s45, 1
    %p49 = scmp.eq.s32.totalorder %s11, 1
    %p50 = scmp.ne.s32.totalorder %s45, %s47
    %p51 = scmp.eq.s32.totalorder %s11, 0
    %p52 = por %p50, %p51
    %p53 = scmp.ne.s32.totalorder %s45, %s47
    %p54 = scmp.eq.s32.totalorder %s16, 1
    %p55 = por %p53, %p54
    %p56 = scmp.ne.s32.totalorder %s47, %s48
    %p57 = scmp.eq.s32.totalorder %s16, 0
    %p58 = por %p56, %p57
    %p59 = scmp.ne.s32.totalorder %s47, %s48
    %p60 = scmp.eq.s32.totalorder %s17, 1
    %p61 = por %p59, %p60
    %p63 = scmp.ne.s32.totalorder %s48, %s62
    %p64 = scmp.eq.s32.totalorder %s17, 0
    %p65 = por %p63, %p64
    %s67 = sadd.s32 %s66, 1
    %p70 = scmp.eq.s32.totalorder %s11, 1
    %p71 = scmp.ne.s32.totalorder %s66, %s68
    %p72 = scmp.eq.s32.totalorder %s11, 0
    %p73 = por %p71, %p72
    %p74 = scmp.ne.s32.totalorder %s66, %s68
    %p75 = scmp.eq.s32.totalorder %s16, 1
    %p76 = por %p74, %p75
    %p77 = scmp.ne.s32.totalorder %s68, %s69
    %p78 = scmp.eq.s32.totalorder %s16, 0
    %p79 = por %p77, %p78
    %p80 = scmp.ne.s32.totalorder %s68, %s69
    %p81 = scmp.eq.s32.totalorder %s17, 1
    %p82 = por %p80, %p81
    %p84 = scmp.ne.s32.totalorder %s69, %s83
    %p85 = scmp.eq.s32.totalorder %s17, 0
    %p86 = por %p84, %p85
    %s88 = sadd.s32 %s87, 1
    %p91 = scmp.eq.s32.totalorder %s11, 1
    %p92 = scmp.ne.s32.totalorder %s87, %s89
    %p93 = scmp.eq.s32.totalorder %s11, 0
    %p94 = por %p92, %p93
    %p95 = scmp.ne.s32.totalorder %s87, %s89
    %p96 = scmp.eq.s32.totalorder %s16, 1
    %p97 = por %p95, %p96
    %p98 = scmp.ne.s32.totalorder %s89, %s90
    %p99 = scmp.eq.s32.totalorder %s16, 0
    %p100 = por %p98, %p99
    %p101 = scmp.ne.s32.totalorder %s89, %s90
    %p102 = scmp.eq.s32.totalorder %s17, 1
    %p103 = por %p101, %p102
    %p105 = scmp.ne.s32.totalorder %s90, %s104
    %p106 = scmp.eq.s32.totalorder %s17, 0
    %p107 = por %p105, %p106
    %s109 = sadd.s32 %s108, 1
    %p112 = scmp.eq.s32.totalorder %s11, 1
    %p113 = scmp.ne.s32.totalorder %s108, %s110
    %p114 = scmp.eq.s32.totalorder %s11, 0
    %p115 = por %p113, %p114
    %p116 = scmp.ne.s32.totalorder %s108, %s110
    %p117 = scmp.eq.s32.totalorder %s16, 1
    %p118 = por %p116, %p117
    %p119 = scmp.ne.s32.totalorder %s110, %s111
    %p120 = scmp.eq.s32.totalorder %s16, 0
    %p121 = por %p119, %p120
    %p122 = scmp.ne.s32.totalorder %s110, %s111
    %p123 = scmp.eq.s32.totalorder %s17, 1
    %p124 = por %p122, %p123
    %p126 = scmp.ne.s32.totalorder %s111, %s125
    %p127 = scmp.eq.s32.totalorder %s17, 0
    %p128 = por %p126, %p127
    %s129 = ssub.s32 %s11, %s18
    %p130 = scmp.eq.s32.totalorder %s129, 0
    %s132 = sadd.s32 %s131, 1
    %s133 = scalar_select %p130, %s131, %s132
    %p136 = pneg %p130
    %p137 = scmp.eq.s32.totalorder %s11, 1
    %p138 = por %p136, %p137
    %p139 = scmp.ne.s32.totalorder %s131, %s134
    %p140 = scmp.eq.s32.totalorder %s11, 0
    %p141 = por %p139, %p140
    %p142 = scmp.ne.s32.totalorder %s131, %s134
    %p143 = scmp.eq.s32.totalorder %s16, 1
    %p144 = por %p142, %p143
    %p145 = scmp.ne.s32.totalorder %s134, %s135
    %p146 = scmp.eq.s32.totalorder %s16, 0
    %p147 = por %p145, %p146
    %p148 = scmp.ne.s32.totalorder %s134, %s135
    %p149 = scmp.eq.s32.totalorder %s17, 1
    %p150 = por %p148, %p149
    %p152 = scmp.ne.s32.totalorder %s135, %s151
    %p153 = scmp.eq.s32.totalorder %s17, 0
    %p154 = por %p152, %p153
    %p155 = scmp.le.s32.totalorder 1, %s11
    %p156 = scmp.lt.s32.totalorder %s11, 3
    %p157 = pnand %p155, %p156
    %p158 = pneg %p157
    // Predicated region
    $region9: #{tpu_custom_call.1} parent=5 // pred_check
      _
    $region10: #{tpu_custom_call.1} parent=5 // pred_check_branch
      %160 = sbr.rel (%p157) target = $region12
    $region11: #{tpu_custom_call.1} parent=5 // pred_region
      %s161 = ssub.s32 %s11, 1
      // Predicated region
      $region13: #{tpu_custom_call.1} parent=11 // pred_check
        %p162 = pneg %p58
      $region14: #{tpu_custom_call.1} parent=11 // pred_check_branch
        %164 = sbr.rel (%p162) target = $region16
      $region15: #{tpu_custom_call.1} parent=11 // pred_region
        _
      $region16: #{tpu_custom_call.1} parent=11 // pred_fallthru
        _
      // Predicated region
      $region17: #{tpu_custom_call.1} parent=11 // pred_check
        %p165 = pneg %p79
      $region18: #{tpu_custom_call.1} parent=11 // pred_check_branch
        %167 = sbr.rel (%p165) target = $region20
      $region19: #{tpu_custom_call.1} parent=11 // pred_region
        _
      $region20: #{tpu_custom_call.1} parent=11 // pred_fallthru
        _
      // Predicated region
      $region21: #{tpu_custom_call.1} parent=11 // pred_check
        %p168 = pneg %p100
      $region22: #{tpu_custom_call.1} parent=11 // pred_check_branch
        %170 = sbr.rel (%p168) target = $region24
      $region23: #{tpu_custom_call.1} parent=11 // pred_region
        _
      $region24: #{tpu_custom_call.1} parent=11 // pred_fallthru
        _
      // Predicated region
      $region25: #{tpu_custom_call.1} parent=11 // pred_check
        %p171 = pneg %p121
      $region26: #{tpu_custom_call.1} parent=11 // pred_check_branch
        %173 = sbr.rel (%p171) target = $region28
      $region27: #{tpu_custom_call.1} parent=11 // pred_region
        _
      $region28: #{tpu_custom_call.1} parent=11 // pred_fallthru
        _
    $region12: #{tpu_custom_call.1} parent=5 // pred_fallthru
      _
    %p174 = scmp.lt.s32.totalorder %s11, 2
    // Predicated region
    $region29: #{tpu_custom_call.1} parent=5 // pred_check
      %p175 = pneg %p174
    $region30: #{tpu_custom_call.1} parent=5 // pred_check_branch
      %177 = sbr.rel (%p175) target = $region32
    $region31: #{tpu_custom_call.1} parent=5 // pred_region
      // Predicated region
      $region33: #{tpu_custom_call.1} parent=31 // pred_check
        %p178 = pneg %p31
      $region34: #{tpu_custom_call.1} parent=31 // pred_check_branch
        %180 = sbr.rel (%p178) target = $region36
      $region35: #{tpu_custom_call.1} parent=31 // pred_region
        %s181 = smul.u32 64, %s11
        %p182 = scmp.lt.s32.totalorder %s181, 127
        %s183 = scalar_select %p182, %s181, 127
        %s184 = smul.addr %s183, 8
        %s185 = scalar_lea.vmem %s0, %s184
        %s186 = smul.u32 64, %s11
      $region36: #{tpu_custom_call.1} parent=31 // pred_fallthru
        _
    $region32: #{tpu_custom_call.1} parent=5 // pred_fallthru
      _
    %p187 = scmp.le.s32.totalorder 1, %s11
    %p188 = scmp.lt.s32.totalorder %s11, 3
    %p189 = pnand %p187, %p188
    %p190 = pneg %p189
    // Predicated region
    $region37: #{tpu_custom_call.1} parent=5 // pred_check
      _
    $region38: #{tpu_custom_call.1} parent=5 // pred_check_branch
      %192 = sbr.rel (%p189) target = $region40
    $region39: #{tpu_custom_call.1} parent=5 // pred_region
      %s193 = ssub.s32 %s11, 1
      %s194 = smul.u32 64, %s16
      %p195 = scmp.lt.s32.totalorder %s194, 127
      %s196 = scalar_select %p195, %s194, 127
      %s197 = smul.addr %s196, 8
      %s198 = scalar_lea.vmem %s0, %s197
      %p199 = pneg %p37
      %p200 = pneg %p34
      %p201 = pneg %p58
      %p202 = pneg %p55
      %p203 = pneg %p79
      %p204 = pneg %p76
      %p205 = pneg %p100
      %p206 = pneg %p97
      %p207 = pneg %p121
      %p208 = pneg %p118
      %p209 = pneg %p147
      %p210 = pneg %p144
      %s211 = smul.u32 64, %s16
      %p212 = scmp.lt.s32.totalorder %s211, 127
      %s213 = scalar_select %p212, %s211, 127
      %s214 = smul.addr %s213, 8
      %s215 = scalar_lea.vmem %s5, %s214
      %s216 = smul.u32 64, %s16
      %p217 = scmp.lt.s32.totalorder %s216, 127
      %s218 = scalar_select %p217, %s216, 127
      %s219 = smul.addr %s218, 8
      %s220 = scalar_lea.vmem %s0, %s219
      %s221 = smul.u32 64, %s16
      %s222 = smul.u32 64, %s16
      %p223 = scmp.lt.s32.totalorder %s222, 127
      %s224 = scalar_select %p223, %s222, 127
      %s225 = smul.addr %s224, 8
      %s226 = scalar_lea.vmem %s5, %s225
      %s227 = smul.u32 64, %s16
      %v228 = vld [vmem:[%s220] sm:$0xff]
      %v229 = vld [vmem:[%s220 + $0x8] sm:$0xff]
      %v230 = vld [vmem:[%s220 + $0x10] sm:$0xff]
      %v231 = vld [vmem:[%s220 + $0x18] sm:$0xff]
      %v232 = vld [vmem:[%s220 + $0x20] sm:$0xff]
      %v233 = vld [vmem:[%s220 + $0x28] sm:$0xff]
      %v234 = vld [vmem:[%s220 + $0x30] sm:$0xff]
      %v235 = vld [vmem:[%s220 + $0x38] sm:$0xff]
      %v236 = vld [vmem:[%s220 + $0x40] sm:$0xff]
      %v237 = vld [vmem:[%s220 + $0x48] sm:$0xff]
      %v238 = vld [vmem:[%s220 + $0x50] sm:$0xff]
      %v239 = vld [vmem:[%s220 + $0x58] sm:$0xff]
      %v240 = vld [vmem:[%s220 + $0x60] sm:$0xff]
      %v241 = vld [vmem:[%s220 + $0x68] sm:$0xff]
      %v242 = vld [vmem:[%s220 + $0x70] sm:$0xff]
      %v243 = vld [vmem:[%s220 + $0x78] sm:$0xff]
      %v244 = vld [vmem:[%s220 + $0x80] sm:$0xff]
      %v245 = vld [vmem:[%s220 + $0x88] sm:$0xff]
      %v246 = vld [vmem:[%s220 + $0x90] sm:$0xff]
      %v247 = vld [vmem:[%s220 + $0x98] sm:$0xff]
      %v248 = vld [vmem:[%s220 + $0xa0] sm:$0xff]
      %v249 = vld [vmem:[%s220 + $0xa8] sm:$0xff]
      %v250 = vld [vmem:[%s220 + $0xb0] sm:$0xff]
      %v251 = vld [vmem:[%s220 + $0xb8] sm:$0xff]
      %v252 = vld [vmem:[%s220 + $0xc0] sm:$0xff]
      %v253 = vld [vmem:[%s220 + $0xc8] sm:$0xff]
      %v254 = vld [vmem:[%s220 + $0xd0] sm:$0xff]
      %v255 = vld [vmem:[%s220 + $0xd8] sm:$0xff]
      %v256 = vld [vmem:[%s220 + $0xe0] sm:$0xff]
      %v257 = vld [vmem:[%s220 + $0xe8] sm:$0xff]
      %v258 = vld [vmem:[%s220 + $0xf0] sm:$0xff]
      %v259 = vld [vmem:[%s220 + $0xf8] sm:$0xff]
      %v260 = vld [vmem:[%s220 + $0x100] sm:$0xff]
      %v261 = vld [vmem:[%s220 + $0x108] sm:$0xff]
      %v262 = vld [vmem:[%s220 + $0x110] sm:$0xff]
      %v263 = vld [vmem:[%s220 + $0x118] sm:$0xff]
      %v264 = vld [vmem:[%s220 + $0x120] sm:$0xff]
      %v265 = vld [vmem:[%s220 + $0x128] sm:$0xff]
      %v266 = vld [vmem:[%s220 + $0x130] sm:$0xff]
      %v267 = vld [vmem:[%s220 + $0x138] sm:$0xff]
      %v268 = vld [vmem:[%s220 + $0x140] sm:$0xff]
      %v269 = vld [vmem:[%s220 + $0x148] sm:$0xff]
      %v270 = vld [vmem:[%s220 + $0x150] sm:$0xff]
      %v271 = vld [vmem:[%s220 + $0x158] sm:$0xff]
      %v272 = vld [vmem:[%s220 + $0x160] sm:$0xff]
      %v273 = vld [vmem:[%s220 + $0x168] sm:$0xff]
      %v274 = vld [vmem:[%s220 + $0x170] sm:$0xff]
      %v275 = vld [vmem:[%s220 + $0x178] sm:$0xff]
      %v276 = vld [vmem:[%s220 + $0x180] sm:$0xff]
      %v277 = vld [vmem:[%s220 + $0x188] sm:$0xff]
      %v278 = vld [vmem:[%s220 + $0x190] sm:$0xff]
      %v279 = vld [vmem:[%s220 + $0x198] sm:$0xff]
      %v280 = vld [vmem:[%s220 + $0x1a0] sm:$0xff]
      %v281 = vld [vmem:[%s220 + $0x1a8] sm:$0xff]
      %v282 = vld [vmem:[%s220 + $0x1b0] sm:$0xff]
      %v283 = vld [vmem:[%s220 + $0x1b8] sm:$0xff]
      %v284 = vld [vmem:[%s220 + $0x1c0] sm:$0xff]
      %v285 = vld [vmem:[%s220 + $0x1c8] sm:$0xff]
      %v286 = vld [vmem:[%s220 + $0x1d0] sm:$0xff]
      %v287 = vld [vmem:[%s220 + $0x1d8] sm:$0xff]
      %v288 = vld [vmem:[%s220 + $0x1e0] sm:$0xff]
      %v289 = vld [vmem:[%s220 + $0x1e8] sm:$0xff]
      %v290 = vld [vmem:[%s220 + $0x1f0] sm:$0xff]
      %v291 = vld [vmem:[%s220 + $0x1f8] sm:$0xff]
      %v292 = vld [vmem:[%s1] sm:$0xff]
      %v293 = vld [vmem:[%s1 + $0x8] sm:$0xff]
      %v294 = vld [vmem:[%s2] sm:$0x1]
      %v296 = vlaneseq
      %v297 = vshrl.u32 %v296, 7
      %v298 = vsub.s32 0, %v297
      %v299 = vrot.slane %v294, %v298
      %vm301 = vcmask 130048
      %v303 = vsel %vm301, %v228, 0
      %v306 = vsel %vm301, %v229, 0
      %v309 = vsel %vm301, %v230, 0
      %v312 = vsel %vm301, %v231, 0
      %v315 = vsel %vm301, %v232, 0
      %v318 = vsel %vm301, %v233, 0
      %v321 = vsel %vm301, %v234, 0
      %v324 = vsel %vm301, %v235, 0
      %v327 = vsel %vm301, %v236, 0
      %v330 = vsel %vm301, %v237, 0
      %v333 = vsel %vm301, %v238, 0
      %v336 = vsel %vm301, %v239, 0
      %v339 = vsel %vm301, %v240, 0
      %v342 = vsel %vm301, %v241, 0
      %v345 = vsel %vm301, %v242, 0
      %v348 = vsel %vm301, %v243, 0
      %v351 = vsel %vm301, %v244, 0
      %v354 = vsel %vm301, %v245, 0
      %v357 = vsel %vm301, %v246, 0
      %v360 = vsel %vm301, %v247, 0
      %v363 = vsel %vm301, %v248, 0
      %v366 = vsel %vm301, %v249, 0
      %v369 = vsel %vm301, %v250, 0
      %v372 = vsel %vm301, %v251, 0
      %v375 = vsel %vm301, %v252, 0
      %v378 = vsel %vm301, %v253, 0
      %v381 = vsel %vm301, %v254, 0
      %v384 = vsel %vm301, %v255, 0
      %v387 = vsel %vm301, %v256, 0
      %v390 = vsel %vm301, %v257, 0
      %v393 = vsel %vm301, %v258, 0
      %v396 = vsel %vm301, %v259, 0
      %v399 = vsel %vm301, %v260, 0
      %v402 = vsel %vm301, %v261, 0
      %v405 = vsel %vm301, %v262, 0
      %v408 = vsel %vm301, %v263, 0
      %v411 = vsel %vm301, %v264, 0
      %v414 = vsel %vm301, %v265, 0
      %v417 = vsel %vm301, %v266, 0
      %v420 = vsel %vm301, %v267, 0
      %v423 = vsel %vm301, %v268, 0
      %v426 = vsel %vm301, %v269, 0
      %v429 = vsel %vm301, %v270, 0
      %v432 = vsel %vm301, %v271, 0
      %v435 = vsel %vm301, %v272, 0
      %v438 = vsel %vm301, %v273, 0
      %v441 = vsel %vm301, %v274, 0
      %v444 = vsel %vm301, %v275, 0
      %v447 = vsel %vm301, %v276, 0
      %v450 = vsel %vm301, %v277, 0
      %v453 = vsel %vm301, %v278, 0
      %v456 = vsel %vm301, %v279, 0
      %v459 = vsel %vm301, %v280, 0
      %v462 = vsel %vm301, %v281, 0
      %v465 = vsel %vm301, %v282, 0
      %v468 = vsel %vm301, %v283, 0
      %v471 = vsel %vm301, %v284, 0
      %v474 = vsel %vm301, %v285, 0
      %v477 = vsel %vm301, %v286, 0
      %v480 = vsel %vm301, %v287, 0
      %v483 = vsel %vm301, %v288, 0
      %v486 = vsel %vm301, %v289, 0
      %v489 = vsel %vm301, %v290, 0
      %v492 = vsel %vm301, %v291, 0
      %494 = vmatprep.subr.mxu0 0.0
      %495 = vmatpush1.msra.mxu0 %v292
      %496 = vmatprep.subr.mxu0 0.0
      %497 = vmatpush1.msra.mxu0 %v293
      %498 = vmatprep.subr.mxu0 0.0
      %499 = vmatpush1.msra.mxu0 0.0
      %500 = vmatprep.subr.mxu0 0.0
      %501 = vmatpush1.msra.mxu0 0.0
      %502 = vmatprep.subr.mxu0 0.0
      %503 = vmatpush1.msra.mxu0 0.0
      %504 = vmatprep.subr.mxu0 0.0
      %505 = vmatpush1.msra.mxu0 0.0
      %506 = vmatprep.subr.mxu0 0.0
      %507 = vmatpush1.msra.mxu0 0.0
      %508 = vmatprep.subr.mxu0 0.0
      %509 = vmatpush1.msra.mxu0 0.0
      %510 = vmatprep.subr.mxu0 0.0
      %511 = vmatpush1.msra.mxu0 0.0
      %512 = vmatprep.subr.mxu0 0.0
      %513 = vmatpush1.msra.mxu0 0.0
      %514 = vmatprep.subr.mxu0 0.0
      %515 = vmatpush1.msra.mxu0 0.0
      %516 = vmatprep.subr.mxu0 0.0
      %517 = vmatpush1.msra.mxu0 0.0
      %518 = vmatprep.subr.mxu0 0.0
      %519 = vmatpush1.msra.mxu0 0.0
      %520 = vmatprep.subr.mxu0 0.0
      %521 = vmatpush1.msra.mxu0 0.0
      %522 = vmatprep.subr.mxu0 0.0
      %523 = vmatpush1.msra.mxu0 0.0
      %524 = vmatprep.subr.mxu0 0.0
      %525 = vmatpush1.msra.mxu0 0.0
      %526 = vmatprep.subr.mxu0 0.0
      %527 = vmatpush1.msra.mxu0 0.0
      %528 = vmatprep.subr.mxu0 0.0
      %529 = vmatpush1.msra.mxu0 0.0
      %530 = vmatprep.subr.mxu0 0.0
      %531 = vmatpush1.msra.mxu0 0.0
      %532 = vmatprep.subr.mxu0 0.0
      %533 = vmatpush1.msra.mxu0 0.0
      %534 = vmatprep.subr.mxu0 0.0
      %535 = vmatpush1.msra.mxu0 0.0
      %536 = vmatprep.subr.mxu0 0.0
      %537 = vmatpush1.msra.mxu0 0.0
      %538 = vmatprep.subr.mxu0 0.0
      %539 = vmatpush1.msra.mxu0 0.0
      %540 = vmatprep.subr.mxu0 0.0
      %541 = vmatpush1.msra.mxu0 0.0
      %542 = vmatprep.subr.mxu0 0.0
      %543 = vmatpush1.msra.mxu0 0.0
      %544 = vmatprep.subr.mxu0 0.0
      %545 = vmatpush1.msra.mxu0 0.0
      %546 = vmatprep.subr.mxu0 0.0
      %547 = vmatpush1.msra.mxu0 0.0
      %548 = vmatprep.subr.mxu0 0.0
      %549 = vmatpush1.msra.mxu0 0.0
      %550 = vmatprep.subr.mxu0 0.0
      %551 = vmatpush1.msra.mxu0 0.0
      %552 = vmatprep.subr.mxu0 0.0
      %553 = vmatpush1.msra.mxu0 0.0
      %554 = vmatprep.subr.mxu0 0.0
      %555 = vmatpush1.msra.mxu0 0.0
      %556 = vmatprep.subr.mxu0 0.0
      %557 = vmatpush1.msra.mxu0 0.0
      %558 = vmatprep.mubr.f32.mxu0 0.0
      %559 = vmatmul.mubr.f32.gmra.mrb[0].mxu0 %v303
      %v560 = vpop.f32.mrb[0].mxu0
      %v561 = vadd.f32 %v299, %v560
      %v562 = vpop.f32.mrb[0].mxu0
      %563 = vmatprep.mubr.f32.mxu0 0.0
      %564 = vmatmul.mubr.f32.gmra.mrb[0].mxu0 %v306
      %v565 = vpop.f32.mrb[0].mxu0
      %v566 = vadd.f32 %v299, %v565
      %v567 = vpop.f32.mrb[0].mxu0
      %568 = vmatprep.mubr.f32.mxu0 0.0
      %569 = vmatmul.mubr.f32.gmra.mrb[0].mxu0 %v309
      %v570 = vpop.f32.mrb[0].mxu0
      %v571 = vadd.f32 %v299, %v570
      %v572 = vpop.f32.mrb[0].mxu0
      %573 = vmatprep.mubr.f32.mxu0 0.0
      %574 = vmatmul.mubr.f32.gmra.mrb[0].mxu0 %v312
      %v575 = vpop.f32.mrb[0].mxu0
      %v576 = vadd.f32 %v299, %v575
      %v577 = vpop.f32.mrb[0].mxu0
      %578 = vmatprep.mubr.f32.mxu0 0.0
      %579 = vmatmul.mubr.f32.gmra.mrb[0].mxu0 %v315
      %v580 = vpop.f32.mrb[0].mxu0
      %v581 = vadd.f32 %v299, %v580
      %v582 = vpop.f32.mrb[0].mxu0
      %583 = vmatprep.mubr.f32.mxu0 0.0
      %584 = vmatmul.mubr.f32.gmra.mrb[0].mxu0 %v318
      %v585 = vpop.f32.mrb[0].mxu0
      %v586 = vadd.f32 %v299, %v585
      %v587 = vpop.f32.mrb[0].mxu0
      %588 = vmatprep.mubr.f32.mxu0 0.0
      %589 = vmatmul.mubr.f32.gmra.mrb[0].mxu0 %v321
      %v590 = vpop.f32.mrb[0].mxu0
      %v591 = vadd.f32 %v299, %v590
      %v592 = vpop.f32.mrb[0].mxu0
      %593 = vmatprep.mubr.f32.mxu0 0.0
      %594 = vmatmul.mubr.f32.gmra.mrb[0].mxu0 %v324
      %v595 = vpop.f32.mrb[0].mxu0
      %v596 = vadd.f32 %v299, %v595
      %v597 = vpop.f32.mrb[0].mxu0
      %598 = vmatprep.mubr.f32.mxu0 0.0
      %599 = vmatmul.mubr.f32.gmra.mrb[0].mxu0 %v327
      %v600 = vpop.f32.mrb[0].mxu0
      %v601 = vadd.f32 %v299, %v600
      %v602 = vpop.f32.mrb[0].mxu0
      %603 = vmatprep.mubr.f32.mxu0 0.0
      %604 = vmatmul.mubr.f32.gmra.mrb[0].mxu0 %v330
      %v605 = vpop.f32.mrb[0].mxu0
      %v606 = vadd.f32 %v299, %v605
      %v607 = vpop.f32.mrb[0].mxu0
      %608 = vmatprep.mubr.f32.mxu0 0.0
      %609 = vmatmul.mubr.f32.gmra.mrb[0].mxu0 %v333
      %v610 = vpop.f32.mrb[0].mxu0
      %v611 = vadd.f32 %v299, %v610
      %v612 = vpop.f32.mrb[0].mxu0
      %613 = vmatprep.mubr.f32.mxu0 0.0
      %614 = vmatmul.mubr.f32.gmra.mrb[0].mxu0 %v336
      %v615 = vpop.f32.mrb[0].mxu0
      %v616 = vadd.f32 %v299, %v615
      %v617 = vpop.f32.mrb[0].mxu0
      %618 = vmatprep.mubr.f32.mxu0 0.0
      %619 = vmatmul.mubr.f32.gmra.mrb[0].mxu0 %v339
      %v620 = vpop.f32.mrb[0].mxu0
      %v621 = vadd.f32 %v299, %v620
      %v622 = vpop.f32.mrb[0].mxu0
      %623 = vmatprep.mubr.f32.mxu0 0.0
      %624 = vmatmul.mubr.f32.gmra.mrb[0].mxu0 %v342
      %v625 = vpop.f32.mrb[0].mxu0
      %v626 = vadd.f32 %v299, %v625
      %v627 = vpop.f32.mrb[0].mxu0
      %628 = vmatprep.mubr.f32.mxu0 0.0
      %629 = vmatmul.mubr.f32.gmra.mrb[0].mxu0 %v345
      %v630 = vpop.f32.mrb[0].mxu0
      %v631 = vadd.f32 %v299, %v630
      %v632 = vpop.f32.mrb[0].mxu0
      %633 = vmatprep.mubr.f32.mxu0 0.0
      %634 = vmatmul.mubr.f32.gmra.mrb[0].mxu0 %v348
      %v635 = vpop.f32.mrb[0].mxu0
      %v636 = vadd.f32 %v299, %v635
      %v637 = vpop.f32.mrb[0].mxu0
      %638 = vmatprep.mubr.f32.mxu0 0.0
      %639 = vmatmul.mubr.f32.gmra.mrb[0].mxu0 %v351
      %v640 = vpop.f32.mrb[0].mxu0
      %v641 = vadd.f32 %v299, %v640
      %v642 = vpop.f32.mrb[0].mxu0
      %643 = vmatprep.mubr.f32.mxu0 0.0
      %644 = vmatmul.mubr.f32.gmra.mrb[0].mxu0 %v354
      %v645 = vpop.f32.mrb[0].mxu0
      %v646 = vadd.f32 %v299, %v645
      %v647 = vpop.f32.mrb[0].mxu0
      %648 = vmatprep.mubr.f32.mxu0 0.0
      %649 = vmatmul.mubr.f32.gmra.mrb[0].mxu0 %v357
      %v650 = vpop.f32.mrb[0].mxu0
      %v651 = vadd.f32 %v299, %v650
      %v652 = vpop.f32.mrb[0].mxu0
      %653 = vmatprep.mubr.f32.mxu0 0.0
      %654 = vmatmul.mubr.f32.gmra.mrb[0].mxu0 %v360
      %v655 = vpop.f32.mrb[0].mxu0
      %v656 = vadd.f32 %v299, %v655
      %v657 = vpop.f32.mrb[0].mxu0
      %658 = vmatprep.mubr.f32.mxu0 0.0
      %659 = vmatmul.mubr.f32.gmra.mrb[0].mxu0 %v363
      %v660 = vpop.f32.mrb[0].mxu0
      %v661 = vadd.f32 %v299, %v660
      %v662 = vpop.f32.mrb[0].mxu0
      %663 = vmatprep.mubr.f32.mxu0 0.0
      %664 = vmatmul.mubr.f32.gmra.mrb[0].mxu0 %v366
      %v665 = vpop.f32.mrb[0].mxu0
      %v666 = vadd.f32 %v299, %v665
      %v667 = vpop.f32.mrb[0].mxu0
      %668 = vmatprep.mubr.f32.mxu0 0.0
      %669 = vmatmul.mubr.f32.gmra.mrb[0].mxu0 %v369
      %v670 = vpop.f32.mrb[0].mxu0
      %v671 = vadd.f32 %v299, %v670
      %v672 = vpop.f32.mrb[0].mxu0
      %673 = vmatprep.mubr.f32.mxu0 0.0
      %674 = vmatmul.mubr.f32.gmra.mrb[0].mxu0 %v372
      %v675 = vpop.f32.mrb[0].mxu0
      %v676 = vadd.f32 %v299, %v675
      %v677 = vpop.f32.mrb[0].mxu0
      %678 = vmatprep.mubr.f32.mxu0 0.0
      %679 = vmatmul.mubr.f32.gmra.mrb[0].mxu0 %v375
      %v680 = vpop.f32.mrb[0].mxu0
      %v681 = vadd.f32 %v299, %v680
      %v682 = vpop.f32.mrb[0].mxu0
      %683 = vmatprep.mubr.f32.mxu0 0.0
      %684 = vmatmul.mubr.f32.gmra.mrb[0].mxu0 %v378
      %v685 = vpop.f32.mrb[0].mxu0
      %v686 = vadd.f32 %v299, %v685
      %v687 = vpop.f32.mrb[0].mxu0
      %688 = vmatprep.mubr.f32.mxu0 0.0
      %689 = vmatmul.mubr.f32.gmra.mrb[0].mxu0 %v381
      %v690 = vpop.f32.mrb[0].mxu0
      %v691 = vadd.f32 %v299, %v690
      %v692 = vpop.f32.mrb[0].mxu0
      %693 = vmatprep.mubr.f32.mxu0 0.0
      %694 = vmatmul.mubr.f32.gmra.mrb[0].mxu0 %v384
      %v695 = vpop.f32.mrb[0].mxu0
      %v696 = vadd.f32 %v299, %v695
      %v697 = vpop.f32.mrb[0].mxu0
      %698 = vmatprep.mubr.f32.mxu0 0.0
      %699 = vmatmul.mubr.f32.gmra.mrb[0].mxu0 %v387
      %v700 = vpop.f32.mrb[0].mxu0
      %v701 = vadd.f32 %v299, %v700
      %v702 = vpop.f32.mrb[0].mxu0
      %703 = vmatprep.mubr.f32.mxu0 0.0
      %704 = vmatmul.mubr.f32.gmra.mrb[0].mxu0 %v390
      %v705 = vpop.f32.mrb[0].mxu0
      %v706 = vadd.f32 %v299, %v705
      %v707 = vpop.f32.mrb[0].mxu0
      %708 = vmatprep.mubr.f32.mxu0 0.0
      %709 = vmatmul.mubr.f32.gmra.mrb[0].mxu0 %v393
      %v710 = vpop.f32.mrb[0].mxu0
      %v711 = vadd.f32 %v299, %v710
      %v712 = vpop.f32.mrb[0].mxu0
      %713 = vmatprep.mubr.f32.mxu0 0.0
      %714 = vmatmul.mubr.f32.gmra.mrb[0].mxu0 %v396
      %v715 = vpop.f32.mrb[0].mxu0
      %v716 = vadd.f32 %v299, %v715
      %v717 = vpop.f32.mrb[0].mxu0
      %718 = vmatprep.mubr.f32.mxu0 0.0
      %719 = vmatmul.mubr.f32.gmra.mrb[0].mxu0 %v399
      %v720 = vpop.f32.mrb[0].mxu0
      %v721 = vadd.f32 %v299, %v720
      %v722 = vpop.f32.mrb[0].mxu0
      %723 = vmatprep.mubr.f32.mxu0 0.0
      %724 = vmatmul.mubr.f32.gmra.mrb[0].mxu0 %v402
      %v725 = vpop.f32.mrb[0].mxu0
      %v726 = vadd.f32 %v299, %v725
      %v727 = vpop.f32.mrb[0].mxu0
      %728 = vmatprep.mubr.f32.mxu0 0.0
      %729 = vmatmul.mubr.f32.gmra.mrb[0].mxu0 %v405
      %v730 = vpop.f32.mrb[0].mxu0
      %v731 = vadd.f32 %v299, %v730
      %v732 = vpop.f32.mrb[0].mxu0
      %733 = vmatprep.mubr.f32.mxu0 0.0
      %734 = vmatmul.mubr.f32.gmra.mrb[0].mxu0 %v408
      %v735 = vpop.f32.mrb[0].mxu0
      %v736 = vadd.f32 %v299, %v735
      %v737 = vpop.f32.mrb[0].mxu0
      %738 = vmatprep.mubr.f32.mxu0 0.0
      %739 = vmatmul.mubr.f32.gmra.mrb[0].mxu0 %v411
      %v740 = vpop.f32.mrb[0].mxu0
      %v741 = vadd.f32 %v299, %v740
      %v742 = vpop.f32.mrb[0].mxu0
      %743 = vmatprep.mubr.f32.mxu0 0.0
      %744 = vmatmul.mubr.f32.gmra.mrb[0].mxu0 %v414
      %v745 = vpop.f32.mrb[0].mxu0
      %v746 = vadd.f32 %v299, %v745
      %v747 = vpop.f32.mrb[0].mxu0
      %748 = vmatprep.mubr.f32.mxu0 0.0
      %749 = vmatmul.mubr.f32.gmra.mrb[0].mxu0 %v417
      %v750 = vpop.f32.mrb[0].mxu0
      %v751 = vadd.f32 %v299, %v750
      %v752 = vpop.f32.mrb[0].mxu0
      %753 = vmatprep.mubr.f32.mxu0 0.0
      %754 = vmatmul.mubr.f32.gmra.mrb[0].mxu0 %v420
      %v755 = vpop.f32.mrb[0].mxu0
      %v756 = vadd.f32 %v299, %v755
      %v757 = vpop.f32.mrb[0].mxu0
      %758 = vmatprep.mubr.f32.mxu0 0.0
      %759 = vmatmul.mubr.f32.gmra.mrb[0].mxu0 %v423
      %v760 = vpop.f32.mrb[0].mxu0
      %v761 = vadd.f32 %v299, %v760
      %v762 = vpop.f32.mrb[0].mxu0
      %763 = vmatprep.mubr.f32.mxu0 0.0
      %764 = vmatmul.mubr.f32.gmra.mrb[0].mxu0 %v426
      %v765 = vpop.f32.mrb[0].mxu0
      %v766 = vadd.f32 %v299, %v765
      %v767 = vpop.f32.mrb[0].mxu0
      %768 = vmatprep.mubr.f32.mxu0 0.0
      %769 = vmatmul.mubr.f32.gmra.mrb[0].mxu0 %v429
      %v770 = vpop.f32.mrb[0].mxu0
      %v771 = vadd.f32 %v299, %v770
      %v772 = vpop.f32.mrb[0].mxu0
      %773 = vmatprep.mubr.f32.mxu0 0.0
      %774 = vmatmul.mubr.f32.gmra.mrb[0].mxu0 %v432
      %v775 = vpop.f32.mrb[0].mxu0
      %v776 = vadd.f32 %v299, %v775
      %v777 = vpop.f32.mrb[0].mxu0
      %778 = vmatprep.mubr.f32.mxu0 0.0
      %779 = vmatmul.mubr.f32.gmra.mrb[0].mxu0 %v435
      %v780 = vpop.f32.mrb[0].mxu0
      %v781 = vadd.f32 %v299, %v780
      %v782 = vpop.f32.mrb[0].mxu0
      %783 = vmatprep.mubr.f32.mxu0 0.0
      %784 = vmatmul.mubr.f32.gmra.mrb[0].mxu0 %v438
      %v785 = vpop.f32.mrb[0].mxu0
      %v786 = vadd.f32 %v299, %v785
      %v787 = vpop.f32.mrb[0].mxu0
      %788 = vmatprep.mubr.f32.mxu0 0.0
      %789 = vmatmul.mubr.f32.gmra.mrb[0].mxu0 %v441
      %v790 = vpop.f32.mrb[0].mxu0
      %v791 = vadd.f32 %v299, %v790
      %v792 = vpop.f32.mrb[0].mxu0
      %793 = vmatprep.mubr.f32.mxu0 0.0
      %794 = vmatmul.mubr.f32.gmra.mrb[0].mxu0 %v444
      %v795 = vpop.f32.mrb[0].mxu0
      %v796 = vadd.f32 %v299, %v795
      %v797 = vpop.f32.mrb[0].mxu0
      %798 = vmatprep.mubr.f32.mxu0 0.0
      %799 = vmatmul.mubr.f32.gmra.mrb[0].mxu0 %v447
      %v800 = vpop.f32.mrb[0].mxu0
      %v801 = vadd.f32 %v299, %v800
      %v802 = vpop.f32.mrb[0].mxu0
      %803 = vmatprep.mubr.f32.mxu0 0.0
      %804 = vmatmul.mubr.f32.gmra.mrb[0].mxu0 %v450
      %v805 = vpop.f32.mrb[0].mxu0
      %v806 = vadd.f32 %v299, %v805
      %v807 = vpop.f32.mrb[0].mxu0
      %808 = vmatprep.mubr.f32.mxu0 0.0
      %809 = vmatmul.mubr.f32.gmra.mrb[0].mxu0 %v453
      %v810 = vpop.f32.mrb[0].mxu0
      %v811 = vadd.f32 %v299, %v810
      %v812 = vpop.f32.mrb[0].mxu0
      %813 = vmatprep.mubr.f32.mxu0 0.0
      %814 = vmatmul.mubr.f32.gmra.mrb[0].mxu0 %v456
      %v815 = vpop.f32.mrb[0].mxu0
      %v816 = vadd.f32 %v299, %v815
      %v817 = vpop.f32.mrb[0].mxu0
      %818 = vmatprep.mubr.f32.mxu0 0.0
      %819 = vmatmul.mubr.f32.gmra.mrb[0].mxu0 %v459
      %v820 = vpop.f32.mrb[0].mxu0
      %v821 = vadd.f32 %v299, %v820
      %v822 = vpop.f32.mrb[0].mxu0
      %823 = vmatprep.mubr.f32.mxu0 0.0
      %824 = vmatmul.mubr.f32.gmra.mrb[0].mxu0 %v462
      %v825 = vpop.f32.mrb[0].mxu0
      %v826 = vadd.f32 %v299, %v825
      %v827 = vpop.f32.mrb[0].mxu0
      %828 = vmatprep.mubr.f32.mxu0 0.0
      %829 = vmatmul.mubr.f32.gmra.mrb[0].mxu0 %v465
      %v830 = vpop.f32.mrb[0].mxu0
      %v831 = vadd.f32 %v299, %v830
      %v832 = vpop.f32.mrb[0].mxu0
      %833 = vmatprep.mubr.f32.mxu0 0.0
      %834 = vmatmul.mubr.f32.gmra.mrb[0].mxu0 %v468
      %v835 = vpop.f32.mrb[0].mxu0
      %v836 = vadd.f32 %v299, %v835
      %v837 = vpop.f32.mrb[0].mxu0
      %838 = vmatprep.mubr.f32.mxu0 0.0
      %839 = vmatmul.mubr.f32.gmra.mrb[0].mxu0 %v471
      %v840 = vpop.f32.mrb[0].mxu0
      %v841 = vadd.f32 %v299, %v840
      %v842 = vpop.f32.mrb[0].mxu0
      %843 = vmatprep.mubr.f32.mxu0 0.0
      %844 = vmatmul.mubr.f32.gmra.mrb[0].mxu0 %v474
      %v845 = vpop.f32.mrb[0].mxu0
      %v846 = vadd.f32 %v299, %v845
      %v847 = vpop.f32.mrb[0].mxu0
      %848 = vmatprep.mubr.f32.mxu0 0.0
      %849 = vmatmul.mubr.f32.gmra.mrb[0].mxu0 %v477
      %v850 = vpop.f32.mrb[0].mxu0
      %v851 = vadd.f32 %v299, %v850
      %v852 = vpop.f32.mrb[0].mxu0
      %853 = vmatprep.mubr.f32.mxu0 0.0
      %854 = vmatmul.mubr.f32.gmra.mrb[0].mxu0 %v480
      %v855 = vpop.f32.mrb[0].mxu0
      %v856 = vadd.f32 %v299, %v855
      %v857 = vpop.f32.mrb[0].mxu0
      %858 = vmatprep.mubr.f32.mxu0 0.0
      %859 = vmatmul.mubr.f32.gmra.mrb[0].mxu0 %v483
      %v860 = vpop.f32.mrb[0].mxu0
      %v861 = vadd.f32 %v299, %v860
      %v862 = vpop.f32.mrb[0].mxu0
      %863 = vmatprep.mubr.f32.mxu0 0.0
      %864 = vmatmul.mubr.f32.gmra.mrb[0].mxu0 %v486
      %v865 = vpop.f32.mrb[0].mxu0
      %v866 = vadd.f32 %v299, %v865
      %v867 = vpop.f32.mrb[0].mxu0
      %868 = vmatprep.mubr.f32.mxu0 0.0
      %869 = vmatmul.mubr.f32.gmra.mrb[0].mxu0 %v489
      %v870 = vpop.f32.mrb[0].mxu0
      %v871 = vadd.f32 %v299, %v870
      %v872 = vpop.f32.mrb[0].mxu0
      %873 = vmatprep.mubr.f32.mxu0 0.0
      %874 = vmatmul.mubr.f32.gmra.mrb[0].mxu0 %v492
      %v875 = vpop.f32.mrb[0].mxu0
      %v876 = vadd.f32 %v299, %v875
      %v877 = vpop.f32.mrb[0].mxu0
      %878 = vdwg.mxu0
      %v879 = vmax.f32 %v561, 0.0
      %v880 = vmax.f32 %v566, 0.0
      %v881 = vmax.f32 %v571, 0.0
      %v882 = vmax.f32 %v576, 0.0
      %v883 = vmax.f32 %v581, 0.0
      %v884 = vmax.f32 %v586, 0.0
      %v885 = vmax.f32 %v591, 0.0
      %v886 = vmax.f32 %v596, 0.0
      %v887 = vmax.f32 %v601, 0.0
      %v888 = vmax.f32 %v606, 0.0
      %v889 = vmax.f32 %v611, 0.0
      %v890 = vmax.f32 %v616, 0.0
      %v891 = vmax.f32 %v621, 0.0
      %v892 = vmax.f32 %v626, 0.0
      %v893 = vmax.f32 %v631, 0.0
      %v894 = vmax.f32 %v636, 0.0
      %v895 = vmax.f32 %v641, 0.0
      %v896 = vmax.f32 %v646, 0.0
      %v897 = vmax.f32 %v651, 0.0
      %v898 = vmax.f32 %v656, 0.0
      %v899 = vmax.f32 %v661, 0.0
      %v900 = vmax.f32 %v666, 0.0
      %v901 = vmax.f32 %v671, 0.0
      %v902 = vmax.f32 %v676, 0.0
      %v903 = vmax.f32 %v681, 0.0
      %v904 = vmax.f32 %v686, 0.0
      %v905 = vmax.f32 %v691, 0.0
      %v906 = vmax.f32 %v696, 0.0
      %v907 = vmax.f32 %v701, 0.0
      %v908 = vmax.f32 %v706, 0.0
      %v909 = vmax.f32 %v711, 0.0
      %v910 = vmax.f32 %v716, 0.0
      %v911 = vmax.f32 %v721, 0.0
      %v912 = vmax.f32 %v726, 0.0
      %v913 = vmax.f32 %v731, 0.0
      %v914 = vmax.f32 %v736, 0.0
      %v915 = vmax.f32 %v741, 0.0
      %v916 = vmax.f32 %v746, 0.0
      %v917 = vmax.f32 %v751, 0.0
      %v918 = vmax.f32 %v756, 0.0
      %v919 = vmax.f32 %v761, 0.0
      %v920 = vmax.f32 %v766, 0.0
      %v921 = vmax.f32 %v771, 0.0
      %v922 = vmax.f32 %v776, 0.0
      %v923 = vmax.f32 %v781, 0.0
      %v924 = vmax.f32 %v786, 0.0
      %v925 = vmax.f32 %v791, 0.0
      %v926 = vmax.f32 %v796, 0.0
      %v927 = vmax.f32 %v801, 0.0
      %v928 = vmax.f32 %v806, 0.0
      %v929 = vmax.f32 %v811, 0.0
      %v930 = vmax.f32 %v816, 0.0
      %v931 = vmax.f32 %v821, 0.0
      %v932 = vmax.f32 %v826, 0.0
      %v933 = vmax.f32 %v831, 0.0
      %v934 = vmax.f32 %v836, 0.0
      %v935 = vmax.f32 %v841, 0.0
      %v936 = vmax.f32 %v846, 0.0
      %v937 = vmax.f32 %v851, 0.0
      %v938 = vmax.f32 %v856, 0.0
      %v939 = vmax.f32 %v861, 0.0
      %v940 = vmax.f32 %v866, 0.0
      %v941 = vmax.f32 %v871, 0.0
      %v942 = vmax.f32 %v876, 0.0
      %v943 = vld [vmem:[%s3] sm:$0x1]
      %v945 = vlaneseq
      %v946 = vshrl.u32 %v945, 7
      %v947 = vsub.s32 0, %v946
      %v948 = vrot.slane %v943, %v947
      %v950 = vmul.f32 %v879, %v948
      %v951 = vmul.f32 %v880, %v948
      %v952 = vmul.f32 %v881, %v948
      %v953 = vmul.f32 %v882, %v948
      %v954 = vmul.f32 %v883, %v948
      %v955 = vmul.f32 %v884, %v948
      %v956 = vmul.f32 %v885, %v948
      %v957 = vmul.f32 %v886, %v948
      %v958 = vmul.f32 %v887, %v948
      %v959 = vmul.f32 %v888, %v948
      %v960 = vmul.f32 %v889, %v948
      %v961 = vmul.f32 %v890, %v948
      %v962 = vmul.f32 %v891, %v948
      %v963 = vmul.f32 %v892, %v948
      %v964 = vmul.f32 %v893, %v948
      %v965 = vmul.f32 %v894, %v948
      %v966 = vmul.f32 %v895, %v948
      %v967 = vmul.f32 %v896, %v948
      %v968 = vmul.f32 %v897, %v948
      %v969 = vmul.f32 %v898, %v948
      %v970 = vmul.f32 %v899, %v948
      %v971 = vmul.f32 %v900, %v948
      %v972 = vmul.f32 %v901, %v948
      %v973 = vmul.f32 %v902, %v948
      %v974 = vmul.f32 %v903, %v948
      %v975 = vmul.f32 %v904, %v948
      %v976 = vmul.f32 %v905, %v948
      %v977 = vmul.f32 %v906, %v948
      %v978 = vmul.f32 %v907, %v948
      %v979 = vmul.f32 %v908, %v948
      %v980 = vmul.f32 %v909, %v948
      %v981 = vmul.f32 %v910, %v948
      %v982 = vmul.f32 %v911, %v948
      %v983 = vmul.f32 %v912, %v948
      %v984 = vmul.f32 %v913, %v948
      %v985 = vmul.f32 %v914, %v948
      %v986 = vmul.f32 %v915, %v948
      %v987 = vmul.f32 %v916, %v948
      %v988 = vmul.f32 %v917, %v948
      %v989 = vmul.f32 %v918, %v948
      %v990 = vmul.f32 %v919, %v948
      %v991 = vmul.f32 %v920, %v948
      %v992 = vmul.f32 %v921, %v948
      %v993 = vmul.f32 %v922, %v948
      %v994 = vmul.f32 %v923, %v948
      %v995 = vmul.f32 %v924, %v948
      %v996 = vmul.f32 %v925, %v948
      %v997 = vmul.f32 %v926, %v948
      %v998 = vmul.f32 %v927, %v948
      %v999 = vmul.f32 %v928, %v948
      %v1000 = vmul.f32 %v929, %v948
      %v1001 = vmul.f32 %v930, %v948
      %v1002 = vmul.f32 %v931, %v948
      %v1003 = vmul.f32 %v932, %v948
      %v1004 = vmul.f32 %v933, %v948
      %v1005 = vmul.f32 %v934, %v948
      %v1006 = vmul.f32 %v935, %v948
      %v1007 = vmul.f32 %v936, %v948
      %v1008 = vmul.f32 %v937, %v948
      %v1009 = vmul.f32 %v938, %v948
      %v1010 = vmul.f32 %v939, %v948
      %v1011 = vmul.f32 %v940, %v948
      %v1012 = vmul.f32 %v941, %v948
      %v1013 = vmul.f32 %v942, %v948
      %v1014 = vld [vmem:[%s4] sm:$0x1]
      %v1016 = vlaneseq
      %v1017 = vshrl.u32 %v1016, 7
      %v1018 = vsub.s32 0, %v1017
      %v1019 = vrot.slane %v1014, %v1018
      %v1021 = vadd.f32 %v950, %v1019
      %v1022 = vadd.f32 %v951, %v1019
      %v1023 = vadd.f32 %v952, %v1019
      %v1024 = vadd.f32 %v953, %v1019
      %v1025 = vadd.f32 %v954, %v1019
      %v1026 = vadd.f32 %v955, %v1019
      %v1027 = vadd.f32 %v956, %v1019
      %v1028 = vadd.f32 %v957, %v1019
      %v1029 = vadd.f32 %v958, %v1019
      %v1030 = vadd.f32 %v959, %v1019
      %v1031 = vadd.f32 %v960, %v1019
      %v1032 = vadd.f32 %v961, %v1019
      %v1033 = vadd.f32 %v962, %v1019
      %v1034 = vadd.f32 %v963, %v1019
      %v1035 = vadd.f32 %v964, %v1019
      %v1036 = vadd.f32 %v965, %v1019
      %v1037 = vadd.f32 %v966, %v1019
      %v1038 = vadd.f32 %v967, %v1019
      %v1039 = vadd.f32 %v968, %v1019
      %v1040 = vadd.f32 %v969, %v1019
      %v1041 = vadd.f32 %v970, %v1019
      %v1042 = vadd.f32 %v971, %v1019
      %v1043 = vadd.f32 %v972, %v1019
      %v1044 = vadd.f32 %v973, %v1019
      %v1045 = vadd.f32 %v974, %v1019
      %v1046 = vadd.f32 %v975, %v1019
      %v1047 = vadd.f32 %v976, %v1019
      %v1048 = vadd.f32 %v977, %v1019
      %v1049 = vadd.f32 %v978, %v1019
      %v1050 = vadd.f32 %v979, %v1019
      %v1051 = vadd.f32 %v980, %v1019
      %v1052 = vadd.f32 %v981, %v1019
      %v1053 = vadd.f32 %v982, %v1019
      %v1054 = vadd.f32 %v983, %v1019
      %v1055 = vadd.f32 %v984, %v1019
      %v1056 = vadd.f32 %v985, %v1019
      %v1057 = vadd.f32 %v986, %v1019
      %v1058 = vadd.f32 %v987, %v1019
      %v1059 = vadd.f32 %v988, %v1019
      %v1060 = vadd.f32 %v989, %v1019
      %v1061 = vadd.f32 %v990, %v1019
      %v1062 = vadd.f32 %v991, %v1019
      %v1063 = vadd.f32 %v992, %v1019
      %v1064 = vadd.f32 %v993, %v1019
      %v1065 = vadd.f32 %v994, %v1019
      %v1066 = vadd.f32 %v995, %v1019
      %v1067 = vadd.f32 %v996, %v1019
      %v1068 = vadd.f32 %v997, %v1019
      %v1069 = vadd.f32 %v998, %v1019
      %v1070 = vadd.f32 %v999, %v1019
      %v1071 = vadd.f32 %v1000, %v1019
      %v1072 = vadd.f32 %v1001, %v1019
      %v1073 = vadd.f32 %v1002, %v1019
      %v1074 = vadd.f32 %v1003, %v1019
      %v1075 = vadd.f32 %v1004, %v1019
      %v1076 = vadd.f32 %v1005, %v1019
      %v1077 = vadd.f32 %v1006, %v1019
      %v1078 = vadd.f32 %v1007, %v1019
      %v1079 = vadd.f32 %v1008, %v1019
      %v1080 = vadd.f32 %v1009, %v1019
      %v1081 = vadd.f32 %v1010, %v1019
      %v1082 = vadd.f32 %v1011, %v1019
      %v1083 = vadd.f32 %v1012, %v1019
      %v1084 = vadd.f32 %v1013, %v1019
      %vm1085 = vcmask 523264
      %1086 = vst.msk [vmem:[%s226] sm:$0xff] %vm1085, %v1021
      %1087 = vst.msk [vmem:[%s226 + $0x8] sm:$0xff] %vm1085, %v1022
      %1088 = vst.msk [vmem:[%s226 + $0x10] sm:$0xff] %vm1085, %v1023
      %1089 = vst.msk [vmem:[%s226 + $0x18] sm:$0xff] %vm1085, %v1024
      %1090 = vst.msk [vmem:[%s226 + $0x20] sm:$0xff] %vm1085, %v1025
      %1091 = vst.msk [vmem:[%s226 + $0x28] sm:$0xff] %vm1085, %v1026
      %1092 = vst.msk [vmem:[%s226 + $0x30] sm:$0xff] %vm1085, %v1027
      %1093 = vst.msk [vmem:[%s226 + $0x38] sm:$0xff] %vm1085, %v1028
      %1094 = vst.msk [vmem:[%s226 + $0x40] sm:$0xff] %vm1085, %v1029
      %1095 = vst.msk [vmem:[%s226 + $0x48] sm:$0xff] %vm1085, %v1030
      %1096 = vst.msk [vmem:[%s226 + $0x50] sm:$0xff] %vm1085, %v1031
      %1097 = vst.msk [vmem:[%s226 + $0x58] sm:$0xff] %vm1085, %v1032
      %1098 = vst.msk [vmem:[%s226 + $0x60] sm:$0xff] %vm1085, %v1033
      %1099 = vst.msk [vmem:[%s226 + $0x68] sm:$0xff] %vm1085, %v1034
      %1100 = vst.msk [vmem:[%s226 + $0x70] sm:$0xff] %vm1085, %v1035
      %1101 = vst.msk [vmem:[%s226 + $0x78] sm:$0xff] %vm1085, %v1036
      %1102 = vst.msk [vmem:[%s226 + $0x80] sm:$0xff] %vm1085, %v1037
      %1103 = vst.msk [vmem:[%s226 + $0x88] sm:$0xff] %vm1085, %v1038
      %1104 = vst.msk [vmem:[%s226 + $0x90] sm:$0xff] %vm1085, %v1039
      %1105 = vst.msk [vmem:[%s226 + $0x98] sm:$0xff] %vm1085, %v1040
      %1106 = vst.msk [vmem:[%s226 + $0xa0] sm:$0xff] %vm1085, %v1041
      %1107 = vst.msk [vmem:[%s226 + $0xa8] sm:$0xff] %vm1085, %v1042
      %1108 = vst.msk [vmem:[%s226 + $0xb0] sm:$0xff] %vm1085, %v1043
      %1109 = vst.msk [vmem:[%s226 + $0xb8] sm:$0xff] %vm1085, %v1044
      %1110 = vst.msk [vmem:[%s226 + $0xc0] sm:$0xff] %vm1085, %v1045
      %1111 = vst.msk [vmem:[%s226 + $0xc8] sm:$0xff] %vm1085, %v1046
      %1112 = vst.msk [vmem:[%s226 + $0xd0] sm:$0xff] %vm1085, %v1047
      %1113 = vst.msk [vmem:[%s226 + $0xd8] sm:$0xff] %vm1085, %v1048
      %1114 = vst.msk [vmem:[%s226 + $0xe0] sm:$0xff] %vm1085, %v1049
      %1115 = vst.msk [vmem:[%s226 + $0xe8] sm:$0xff] %vm1085, %v1050
      %1116 = vst.msk [vmem:[%s226 + $0xf0] sm:$0xff] %vm1085, %v1051
      %1117 = vst.msk [vmem:[%s226 + $0xf8] sm:$0xff] %vm1085, %v1052
      %1118 = vst.msk [vmem:[%s226 + $0x100] sm:$0xff] %vm1085, %v1053
      %1119 = vst.msk [vmem:[%s226 + $0x108] sm:$0xff] %vm1085, %v1054
      %1120 = vst.msk [vmem:[%s226 + $0x110] sm:$0xff] %vm1085, %v1055
      %1121 = vst.msk [vmem:[%s226 + $0x118] sm:$0xff] %vm1085, %v1056
      %1122 = vst.msk [vmem:[%s226 + $0x120] sm:$0xff] %vm1085, %v1057
      %1123 = vst.msk [vmem:[%s226 + $0x128] sm:$0xff] %vm1085, %v1058
      %1124 = vst.msk [vmem:[%s226 + $0x130] sm:$0xff] %vm1085, %v1059
      %1125 = vst.msk [vmem:[%s226 + $0x138] sm:$0xff] %vm1085, %v1060
      %1126 = vst.msk [vmem:[%s226 + $0x140] sm:$0xff] %vm1085, %v1061
      %1127 = vst.msk [vmem:[%s226 + $0x148] sm:$0xff] %vm1085, %v1062
      %1128 = vst.msk [vmem:[%s226 + $0x150] sm:$0xff] %vm1085, %v1063
      %1129 = vst.msk [vmem:[%s226 + $0x158] sm:$0xff] %vm1085, %v1064
      %1130 = vst.msk [vmem:[%s226 + $0x160] sm:$0xff] %vm1085, %v1065
      %1131 = vst.msk [vmem:[%s226 + $0x168] sm:$0xff] %vm1085, %v1066
      %1132 = vst.msk [vmem:[%s226 + $0x170] sm:$0xff] %vm1085, %v1067
      %1133 = vst.msk [vmem:[%s226 + $0x178] sm:$0xff] %vm1085, %v1068
      %1134 = vst.msk [vmem:[%s226 + $0x180] sm:$0xff] %vm1085, %v1069
      %1135 = vst.msk [vmem:[%s226 + $0x188] sm:$0xff] %vm1085, %v1070
      %1136 = vst.msk [vmem:[%s226 + $0x190] sm:$0xff] %vm1085, %v1071
      %1137 = vst.msk [vmem:[%s226 + $0x198] sm:$0xff] %vm1085, %v1072
      %1138 = vst.msk [vmem:[%s226 + $0x1a0] sm:$0xff] %vm1085, %v1073
      %1139 = vst.msk [vmem:[%s226 + $0x1a8] sm:$0xff] %vm1085, %v1074
      %1140 = vst.msk [vmem:[%s226 + $0x1b0] sm:$0xff] %vm1085, %v1075
      %1141 = vst.msk [vmem:[%s226 + $0x1b8] sm:$0xff] %vm1085, %v1076
      %1142 = vst.msk [vmem:[%s226 + $0x1c0] sm:$0xff] %vm1085, %v1077
      %1143 = vst.msk [vmem:[%s226 + $0x1c8] sm:$0xff] %vm1085, %v1078
      %1144 = vst.msk [vmem:[%s226 + $0x1d0] sm:$0xff] %vm1085, %v1079
      %1145 = vst.msk [vmem:[%s226 + $0x1d8] sm:$0xff] %vm1085, %v1080
      %1146 = vst.msk [vmem:[%s226 + $0x1e0] sm:$0xff] %vm1085, %v1081
      %1147 = vst.msk [vmem:[%s226 + $0x1e8] sm:$0xff] %vm1085, %v1082
      %1148 = vst.msk [vmem:[%s226 + $0x1f0] sm:$0xff] %vm1085, %v1083
      %1149 = vst.msk [vmem:[%s226 + $0x1f8] sm:$0xff] %vm1085, %v1084
      %s1150 = smul.u32 64, %s16
      %p1151 = scmp.lt.s32.totalorder %s1150, 127
      %s1152 = scalar_select %p1151, %s1150, 127
      %s1153 = smul.addr %s1152, 8
      %s1154 = scalar_lea.vmem %s5, %s1153
      // Predicated region
      $region41: #{tpu_custom_call.1} parent=39 // pred_check
        %p1155 = pneg %p144
      $region42: #{tpu_custom_call.1} parent=39 // pred_check_branch
        %1157 = sbr.rel (%p1155) target = $region44
      $region43: #{tpu_custom_call.1} parent=39 // pred_region
        %s1158 = smul.u32 64, %s16
      $region44: #{tpu_custom_call.1} parent=39 // pred_fallthru
        _
    $region40: #{tpu_custom_call.1} parent=5 // pred_fallthru
      _
    %p1159 = scmp.le.s32.totalorder 2, %s11
    // Predicated region
    $region45: #{tpu_custom_call.1} parent=5 // pred_check
      %p1160 = pneg %p1159
    $region46: #{tpu_custom_call.1} parent=5 // pred_check_branch
      %1162 = sbr.rel (%p1160) target = $region48
    $region47: #{tpu_custom_call.1} parent=5 // pred_region
      %s1163 = ssub.s32 %s11, 2
      // Predicated region
      $region49: #{tpu_custom_call.1} parent=47 // pred_check
        %p1164 = pneg %p150
      $region50: #{tpu_custom_call.1} parent=47 // pred_check_branch
        %1166 = sbr.rel (%p1164) target = $region52
      $region51: #{tpu_custom_call.1} parent=47 // pred_region
        %s1167 = smul.u32 64, %s17
        %p1168 = scmp.lt.s32.totalorder %s1167, 127
        %s1169 = scalar_select %p1168, %s1167, 127
        %s1170 = smul.addr %s1169, 8
        %s1171 = scalar_lea.vmem %s5, %s1170
      $region52: #{tpu_custom_call.1} parent=47 // pred_fallthru
        _
    $region48: #{tpu_custom_call.1} parent=5 // pred_fallthru
      _
  $region6: #{tpu_custom_call.1} parent=0 // loop_footer
    %s15 = sadd.s32 1, %s11
  $region7: #{tpu_custom_call.1} parent=0 // loop_footer_branch
    %10 = sbr.rel target = $region3
  $region8: #{tpu_custom_call.1} parent=0 // loop_exit
    _

</llo_original>
